<compile_context>
chip_gen: v5e
topology: v5e:2x2
jax: 0.10.0
libtpu: 0.0.40
codegen_flags: <defaults>
</compile_context>

<pallas_src>
import functools

import jax
import jax.numpy as jnp
from jax.experimental import pallas as pl
from jax.experimental.pallas import tpu as pltpu


def _guided_filter_kernel(x_ref, y_ref, bh_ref, bwd_ref, invn_ref, o_ref, *, eps):
    # x_ref/y_ref/o_ref: (1, H, P*W) blocks (P planes packed along lanes)
    # bh_ref: (H, H) band matrix; bwd_ref: (P*W, P*W) block-diag band matrix
    # invn_ref: (H, P*W) precomputed 1 / box(ones), tiled across the P planes
    xp = x_ref[0].astype(jnp.float32)           # (H, P*W)
    yp = y_ref[0].astype(jnp.float32)           # (H, P*W)
    bh = bh_ref[...]                            # (H, H)
    bwd = bwd_ref[...]                          # (P*W, P*W)
    inv_n = invn_ref[...]                       # (H, P*W)

    def box(m):
        # box(M) = B_h @ M @ blockdiag(B_w): clipped [i-r,i+r]x[j-j+r] window sum
        t = jnp.dot(bh, m, preferred_element_type=jnp.float32)
        return jnp.dot(t, bwd, preferred_element_type=jnp.float32)

    mean_x = box(xp) * inv_n
    mean_y = box(yp) * inv_n
    cov_xy = box(xp * yp) * inv_n - mean_x * mean_y
    var_x = box(xp * xp) * inv_n - mean_x * mean_x

    a = cov_xy / (var_x + eps)
    b = mean_y - a * mean_x

    mean_a = box(a) * inv_n
    mean_b = box(b) * inv_n

    o_ref[0] = (mean_a * xp + mean_b).astype(o_ref.dtype)


def _pick_chunk(planes, h, w, itemsize=4, lane_target=512,
                budget_bytes=14 * 1024 * 1024):
    """Largest divisor P of `planes` with P*W <= lane_target (or P==1) that fits VMEM."""
    best = 1
    for p in range(1, planes + 1):
        if planes % p:
            continue
        pw = p * w
        if p > 1 and pw > lane_target:
            break
        slab = h * pw * itemsize
        # 2 inputs + 1 output double-buffered, ~12 live f32 intermediates,
        # constants (bh, block-diag bw, inv_n) double-buffered by default.
        est = (3 * 2 + 12) * slab + 2 * (h * h + pw * pw + h * pw) * itemsize
        if est <= budget_bytes:
            best = p
    return best


def guided_filter(x, y, r, eps=1e-8):
    """x, y: (N, C, H, W) arrays (NCHW, matching the PyTorch module)."""
    n_x, c_x, h, w = x.shape
    n_y, c_y, h_y, w_y = y.shape
    assert n_x == n_y
    assert c_x == 1 or c_x == c_y
    assert h == h_y and w == w_y
    assert h > 2 * r + 1 and w > 2 * r + 1

    if c_x == 1 and c_y != 1:
        # TODO(synk): could avoid materializing via a plane//C index_map, but the
        # lane-packing below makes that awkward; broadcast in the wrapper instead.
        x = jnp.broadcast_to(x, y.shape)

    planes = n_y * c_y
    p_chunk = _pick_chunk(planes, h, w)
    n_chunks = planes // p_chunk
    pw = p_chunk * w

    # Pack (planes, H, W) -> (n_chunks, H, P*W): planes of a chunk go along lanes.
    def pack(t):
        t = t.reshape(n_chunks, p_chunk, h, w)
        t = t.transpose(0, 2, 1, 3)
        return t.reshape(n_chunks, h, pw)

    xs = pack(x.reshape(planes, h, w))
    ys = pack(y.reshape(planes, h, w))

    # Banded ones-matrices implementing the clipped box window (f32 MXU operands).
    ih = jnp.arange(h)
    iw = jnp.arange(w)
    bh = (jnp.abs(ih[:, None] - ih[None, :]) <= r).astype(jnp.float32)      # (H, H)
    bw = (jnp.abs(iw[:, None] - iw[None, :]) <= r).astype(jnp.float32)      # (W, W)
    bwd = jnp.kron(jnp.eye(p_chunk, dtype=jnp.float32), bw)                 # (P*W, P*W)

    # Hoisted normalization: inv_n = 1 / box(ones), tiled across packed planes.
    n_box = bh @ jnp.ones((h, w), jnp.float32) @ bw                         # (H, W)
    inv_n = jnp.tile(1.0 / n_box, (1, p_chunk))                             # (H, P*W)

    out = pl.pallas_call(
        functools.partial(_guided_filter_kernel, eps=float(eps)),
        out_shape=jax.ShapeDtypeStruct((n_chunks, h, pw), y.dtype),
        grid=(n_chunks,),
        in_specs=[
            pl.BlockSpec((1, h, pw), lambda i: (i, 0, 0)),   # x slab
            pl.BlockSpec((1, h, pw), lambda i: (i, 0, 0)),   # y slab
            pl.BlockSpec((h, h), lambda i: (0, 0)),          # B_h (constant)
            pl.BlockSpec((pw, pw), lambda i: (0, 0)),        # block-diag B_w (constant)
            pl.BlockSpec((h, pw), lambda i: (0, 0)),         # inv_n (constant)
        ],
        out_specs=pl.BlockSpec((1, h, pw), lambda i: (i, 0, 0)),
        compiler_params=pltpu.CompilerParams(
            dimension_semantics=("parallel",),
            vmem_limit_bytes=48 * 1024 * 1024,
        ),
    )(xs, ys, bh, bwd, inv_n)

    # Unpack (n_chunks, H, P*W) -> (N, C, H, W).
    out = out.reshape(n_chunks, h, p_chunk, w).transpose(0, 2, 1, 3)
    return out.reshape(n_y, c_y, h, w)


# ---------------------------------------------------------------------------
# Pure-JAX reference that mirrors the PyTorch cumsum/diff implementation,
# used as a correctness check only.
# ---------------------------------------------------------------------------
def _diff_x(inp, r):
    left = inp[:, :, r:2 * r + 1]
    middle = inp[:, :, 2 * r + 1:] - inp[:, :, :-2 * r - 1]
    right = inp[:, :, -1:] - inp[:, :, -2 * r - 1:-r - 1]
    return jnp.concatenate([left, middle, right], axis=2)


def _diff_y(inp, r):
    left = inp[:, :, :, r:2 * r + 1]
    middle = inp[:, :, :, 2 * r + 1:] - inp[:, :, :, :-2 * r - 1]
    right = inp[:, :, :, -1:] - inp[:, :, :, -2 * r - 1:-r - 1]
    return jnp.concatenate([left, middle, right], axis=3)


def _boxfilter_ref(x, r):
    return _diff_y(_diff_x(jnp.cumsum(x, axis=2), r).cumsum(axis=3), r)


def _guided_filter_ref(x, y, r, eps):
    n, c, h, w = y.shape
    if x.shape[1] == 1 and c != 1:
        x = jnp.broadcast_to(x, y.shape)
    n_box = _boxfilter_ref(jnp.ones((1, 1, h, w), x.dtype), r)
    mean_x = _boxfilter_ref(x, r) / n_box
    mean_y = _boxfilter_ref(y, r) / n_box
    cov_xy = _boxfilter_ref(x * y, r) / n_box - mean_x * mean_y
    var_x = _boxfilter_ref(x * x, r) / n_box - mean_x * mean_x
    a = cov_xy / (var_x + eps)
    b = mean_y - a * mean_x
    mean_a = _boxfilter_ref(a, r) / n_box
    mean_b = _boxfilter_ref(b, r) / n_box
    return mean_a * x + mean_b


if __name__ == "__main__":
    key = jax.random.PRNGKey(0)
    kx, ky = jax.random.split(key)

    N, C, H, W = 2, 4, 16, 16
    r, eps = 4, 1e-8   # H, W > 2*r + 1 = 9

    x = jax.random.normal(kx, (N, C, H, W), dtype=jnp.float32)
    y = jax.random.normal(ky, (N, C, H, W), dtype=jnp.float32)

    out = guided_filter(x, y, r, eps)
    out = jax.block_until_ready(out)

    ref = _guided_filter_ref(x, y, r, eps)
    assert out.shape == ref.shape == (N, C, H, W)
    assert jnp.allclose(out, ref, rtol=1e-3, atol=1e-3), "mismatch vs reference"

    print("KERNEL_OK")
</pallas_src>

<mosaic_0001>
module attributes {stable_mosaic.version = 11 : i64} {
  func.func @_guided_filter_kernel(%arg0: i32, %arg1: memref<1x16x128xf32, #tpu.memory_space<vmem>>, %arg2: memref<1x16x128xf32, #tpu.memory_space<vmem>>, %arg3: memref<16x16xf32, #tpu.memory_space<vmem>>, %arg4: memref<128x128xf32, #tpu.memory_space<vmem>>, %arg5: memref<16x128xf32, #tpu.memory_space<vmem>>, %arg6: memref<1x16x128xf32, #tpu.memory_space<vmem>>) attributes {dimension_semantics = [#tpu.dimension_semantics<parallel>], iteration_bounds = array<i64: 1>, scalar_prefetch = 0 : i64, scratch_operands = 0 : i64, tpu.core_type = #tpu.core_type<tc>, window_params = [{transform_indices = @transform_0, window_bounds = array<i64: 1, 16, 128>}, {transform_indices = @transform_1, window_bounds = array<i64: 1, 16, 128>}, {pipeline_mode = #tpu.pipeline_mode<synchronous>, transform_indices = @transform_2, window_bounds = array<i64: 16, 16>}, {pipeline_mode = #tpu.pipeline_mode<synchronous>, transform_indices = @transform_3, window_bounds = array<i64: 128, 128>}, {pipeline_mode = #tpu.pipeline_mode<synchronous>, transform_indices = @transform_4, window_bounds = array<i64: 16, 128>}, {transform_indices = @transform_5, window_bounds = array<i64: 1, 16, 128>}]} {
    %c0 = arith.constant 0 : index
    %c0_0 = arith.constant 0 : index
    %c0_1 = arith.constant 0 : index
    %0 = vector.load %arg1[%c0, %c0_0, %c0_1] : memref<1x16x128xf32, #tpu.memory_space<vmem>>, vector<1x16x128xf32>
    %1 = vector.shape_cast %0 : vector<1x16x128xf32> to vector<16x128xf32>
    %c0_2 = arith.constant 0 : index
    %c0_3 = arith.constant 0 : index
    %c0_4 = arith.constant 0 : index
    %2 = vector.load %arg2[%c0_2, %c0_3, %c0_4] : memref<1x16x128xf32, #tpu.memory_space<vmem>>, vector<1x16x128xf32>
    %3 = vector.shape_cast %2 : vector<1x16x128xf32> to vector<16x128xf32>
    %c0_5 = arith.constant 0 : index
    %c0_6 = arith.constant 0 : index
    %4 = vector.load %arg3[%c0_5, %c0_6] : memref<16x16xf32, #tpu.memory_space<vmem>>, vector<16x16xf32>
    %c0_7 = arith.constant 0 : index
    %c0_8 = arith.constant 0 : index
    %5 = vector.load %arg4[%c0_7, %c0_8] : memref<128x128xf32, #tpu.memory_space<vmem>>, vector<128x128xf32>
    %c0_9 = arith.constant 0 : index
    %c0_10 = arith.constant 0 : index
    %6 = vector.load %arg5[%c0_9, %c0_10] : memref<16x128xf32, #tpu.memory_space<vmem>>, vector<16x128xf32>
    %cst = arith.constant dense<0.000000e+00> : vector<16x128xf32>
    %7 = tpu.matmul %4, %1, %cst {dimension_numbers = #tpu.dot_dimension_numbers<[1], [0], [0], [1], [0, 0, 1, 1], [], []>} : vector<16x16xf32>, vector<16x128xf32>, vector<16x128xf32> -> vector<16x128xf32>
    %cst_11 = arith.constant dense<0.000000e+00> : vector<16x128xf32>
    %8 = tpu.matmul %7, %5, %cst_11 {dimension_numbers = #tpu.dot_dimension_numbers<[1], [0], [0], [1], [0, 0, 1, 1], [], []>} : vector<16x128xf32>, vector<128x128xf32>, vector<16x128xf32> -> vector<16x128xf32>
    %9 = arith.mulf %8, %6 : vector<16x128xf32>
    %cst_12 = arith.constant dense<0.000000e+00> : vector<16x128xf32>
    %10 = tpu.matmul %4, %3, %cst_12 {dimension_numbers = #tpu.dot_dimension_numbers<[1], [0], [0], [1], [0, 0, 1, 1], [], []>} : vector<16x16xf32>, vector<16x128xf32>, vector<16x128xf32> -> vector<16x128xf32>
    %cst_13 = arith.constant dense<0.000000e+00> : vector<16x128xf32>
    %11 = tpu.matmul %10, %5, %cst_13 {dimension_numbers = #tpu.dot_dimension_numbers<[1], [0], [0], [1], [0, 0, 1, 1], [], []>} : vector<16x128xf32>, vector<128x128xf32>, vector<16x128xf32> -> vector<16x128xf32>
    %12 = arith.mulf %11, %6 : vector<16x128xf32>
    %13 = arith.mulf %1, %3 : vector<16x128xf32>
    %cst_14 = arith.constant dense<0.000000e+00> : vector<16x128xf32>
    %14 = tpu.matmul %4, %13, %cst_14 {dimension_numbers = #tpu.dot_dimension_numbers<[1], [0], [0], [1], [0, 0, 1, 1], [], []>} : vector<16x16xf32>, vector<16x128xf32>, vector<16x128xf32> -> vector<16x128xf32>
    %cst_15 = arith.constant dense<0.000000e+00> : vector<16x128xf32>
    %15 = tpu.matmul %14, %5, %cst_15 {dimension_numbers = #tpu.dot_dimension_numbers<[1], [0], [0], [1], [0, 0, 1, 1], [], []>} : vector<16x128xf32>, vector<128x128xf32>, vector<16x128xf32> -> vector<16x128xf32>
    %16 = arith.mulf %15, %6 : vector<16x128xf32>
    %17 = arith.mulf %9, %12 : vector<16x128xf32>
    %18 = arith.subf %16, %17 : vector<16x128xf32>
    %19 = arith.mulf %1, %1 : vector<16x128xf32>
    %cst_16 = arith.constant dense<0.000000e+00> : vector<16x128xf32>
    %20 = tpu.matmul %4, %19, %cst_16 {dimension_numbers = #tpu.dot_dimension_numbers<[1], [0], [0], [1], [0, 0, 1, 1], [], []>} : vector<16x16xf32>, vector<16x128xf32>, vector<16x128xf32> -> vector<16x128xf32>
    %cst_17 = arith.constant dense<0.000000e+00> : vector<16x128xf32>
    %21 = tpu.matmul %20, %5, %cst_17 {dimension_numbers = #tpu.dot_dimension_numbers<[1], [0], [0], [1], [0, 0, 1, 1], [], []>} : vector<16x128xf32>, vector<128x128xf32>, vector<16x128xf32> -> vector<16x128xf32>
    %22 = arith.mulf %21, %6 : vector<16x128xf32>
    %23 = arith.mulf %9, %9 : vector<16x128xf32>
    %24 = arith.subf %22, %23 : vector<16x128xf32>
    %cst_18 = arith.constant 9.99999993E-9 : f32
    %25 = vector.broadcast %cst_18 : f32 to vector<16x128xf32>
    %26 = arith.addf %24, %25 : vector<16x128xf32>
    %27 = arith.divf %18, %26 : vector<16x128xf32>
    %28 = arith.mulf %27, %9 : vector<16x128xf32>
    %29 = arith.subf %12, %28 : vector<16x128xf32>
    %cst_19 = arith.constant dense<0.000000e+00> : vector<16x128xf32>
    %30 = tpu.matmul %4, %27, %cst_19 {dimension_numbers = #tpu.dot_dimension_numbers<[1], [0], [0], [1], [0, 0, 1, 1], [], []>} : vector<16x16xf32>, vector<16x128xf32>, vector<16x128xf32> -> vector<16x128xf32>
    %cst_20 = arith.constant dense<0.000000e+00> : vector<16x128xf32>
    %31 = tpu.matmul %30, %5, %cst_20 {dimension_numbers = #tpu.dot_dimension_numbers<[1], [0], [0], [1], [0, 0, 1, 1], [], []>} : vector<16x128xf32>, vector<128x128xf32>, vector<16x128xf32> -> vector<16x128xf32>
    %32 = arith.mulf %31, %6 : vector<16x128xf32>
    %cst_21 = arith.constant dense<0.000000e+00> : vector<16x128xf32>
    %33 = tpu.matmul %4, %29, %cst_21 {dimension_numbers = #tpu.dot_dimension_numbers<[1], [0], [0], [1], [0, 0, 1, 1], [], []>} : vector<16x16xf32>, vector<16x128xf32>, vector<16x128xf32> -> vector<16x128xf32>
    %cst_22 = arith.constant dense<0.000000e+00> : vector<16x128xf32>
    %34 = tpu.matmul %33, %5, %cst_22 {dimension_numbers = #tpu.dot_dimension_numbers<[1], [0], [0], [1], [0, 0, 1, 1], [], []>} : vector<16x128xf32>, vector<128x128xf32>, vector<16x128xf32> -> vector<16x128xf32>
    %35 = arith.mulf %34, %6 : vector<16x128xf32>
    %36 = arith.mulf %32, %1 : vector<16x128xf32>
    %37 = arith.addf %36, %35 : vector<16x128xf32>
    %c0_23 = arith.constant 0 : index
    %c0_24 = arith.constant 0 : index
    %c0_25 = arith.constant 0 : index
    %38 = vector.load %arg6[%c0_23, %c0_24, %c0_25] : memref<1x16x128xf32, #tpu.memory_space<vmem>>, vector<1x16x128xf32>
    %39 = vector.shape_cast %38 : vector<1x16x128xf32> to vector<16x128xf32>
    %40 = vector.shape_cast %37 : vector<16x128xf32> to vector<1x16x128xf32>
    tpu.vector_store %arg6[%c0_23, %c0_24, %c0_25], %40 {strides = array<i32>} : memref<1x16x128xf32, #tpu.memory_space<vmem>>, vector<1x16x128xf32>,
    return
  }
  func.func @transform_0(%arg0: i32) -> (i32, i32, i32) {
    %c0_i32 = arith.constant 0 : i32
    %c0_i32_0 = arith.constant 0 : i32
    %c0_i32_1 = arith.constant 0 : i32
    return %arg0, %c0_i32, %c0_i32_0 : i32, i32, i32
  }
  func.func @transform_1(%arg0: i32) -> (i32, i32, i32) {
    %c0_i32 = arith.constant 0 : i32
    %c0_i32_0 = arith.constant 0 : i32
    %c0_i32_1 = arith.constant 0 : i32
    return %arg0, %c0_i32, %c0_i32_0 : i32, i32, i32
  }
  func.func @transform_2(%arg0: i32) -> (i32, i32) {
    %c0_i32 = arith.constant 0 : i32
    %c0_i32_0 = arith.constant 0 : i32
    %c0_i32_1 = arith.constant 0 : i32
    return %c0_i32, %c0_i32_0 : i32, i32
  }
  func.func @transform_3(%arg0: i32) -> (i32, i32) {
    %c0_i32 = arith.constant 0 : i32
    %c0_i32_0 = arith.constant 0 : i32
    %c0_i32_1 = arith.constant 0 : i32
    return %c0_i32, %c0_i32_0 : i32, i32
  }
  func.func @transform_4(%arg0: i32) -> (i32, i32) {
    %c0_i32 = arith.constant 0 : i32
    %c0_i32_0 = arith.constant 0 : i32
    %c0_i32_1 = arith.constant 0 : i32
    return %c0_i32, %c0_i32_0 : i32, i32
  }
  func.func @transform_5(%arg0: i32) -> (i32, i32, i32) {
    %c0_i32 = arith.constant 0 : i32
    %c0_i32_0 = arith.constant 0 : i32
    %c0_i32_1 = arith.constant 0 : i32
    return %arg0, %c0_i32, %c0_i32_0 : i32, i32, i32
  }
}

</mosaic_0001>

<llo_original>
// kernel: tpu_custom_call.1
$region0: #{tpu_custom_call.1}
  #allocation0 [shape = 'u32[]', space=smem, size = 0x4, offset = 0x4, fixed_abs, tag = 'smem constant byte address 0x4 - core index']
  #allocation1 [shape = 'u32[72,128]{1,0:T(1,128)}', space=vmem, size = 0x9000, scoped, tag = 'internal scratch']
  %s0 = inlined_call_operand.hbm [shape: f32[1,16,128], index: 0, kind: input, shape index: {}]
  %s1 = inlined_call_operand.hbm [shape: f32[1,16,128], index: 1, kind: input, shape index: {}]
  %s2 = inlined_call_operand.hbm [shape: f32[16,16], index: 2, kind: input, shape index: {}]
  %s3 = inlined_call_operand.hbm [shape: f32[128,128], index: 3, kind: input, shape index: {}]
  %s4 = inlined_call_operand.hbm [shape: f32[16,128], index: 4, kind: input, shape index: {}]
  %s5 = inlined_call_operand.hbm [shape: f32[1,16,128], index: 5, kind: output, shape index: {}]
  %s6 = sld [smem:[#allocation0]]
  $region50: #{tpu_custom_call.1} parent=0
    _
  %s8 = ssub.s32 1, %s6
  %s9 = scalar_select 0, %s8, %s6
  $region1: #{tpu_custom_call.1} parent=0
    #allocation2 [shape = 'u8[8192]{0}', space=vmem, size = 0x2000, scoped, tag = 'input window, operand 0, single buffered']
    #allocation3 [shape = 's32[1]{0}', space=sflag, size = 0x4, scoped, tag = 'scoped memory for tpu_custom_call.1']
    #allocation4 [shape = 's32[1]{0}', space=sflag, size = 0x4, scoped, tag = 'scoped memory for tpu_custom_call.1']
    #allocation5 [shape = 'u8[8192]{0}', space=vmem, size = 0x2000, scoped, tag = 'input window, operand 1, single buffered']
    #allocation6 [shape = 's32[1]{0}', space=sflag, size = 0x4, scoped, tag = 'scoped memory for tpu_custom_call.1']
    #allocation7 [shape = 'u8[8192]{0}', space=vmem, size = 0x2000, scoped, tag = 'input window, operand 2, single buffered']
    #allocation8 [shape = 'u8[65536]{0}', space=vmem, size = 0x10000, scoped, tag = 'input window, operand 3, single buffered']
    #allocation9 [shape = 's32[1]{0}', space=sflag, size = 0x4, scoped, tag = 'scoped memory for tpu_custom_call.1']
    #allocation10 [shape = 'u8[8192]{0}', space=vmem, size = 0x2000, scoped, tag = 'input window, operand 4, single buffered']
    #allocation11 [shape = 'u8[8192]{0}', space=vmem, size = 0x2000, scoped, tag = 'output window, operand 0, single buffered']
    %10 = vsyncpa [#allocation3], 0
    %11 = vsyncpa [#allocation6], 0
    %12 = vsyncpa [#allocation9], 0
    %13 = vsyncpa [#allocation4], 0
    // Predicated region
    $region2: #{tpu_custom_call.1} parent=1 // pred_check
      _
    $region3: #{tpu_custom_call.1} parent=1 // pred_check_branch
      %15 = sbr.rel (0) target = $region5
    $region4: #{tpu_custom_call.1} parent=1 // pred_region
      %17 = vsyncadd [#allocation3], 0
      %s18 = sshll.u32 %s0, 4
      %s19 = int_to_ptr.hbm [resolvable:$true] %s18
      %s20 = sshll.u32 [#allocation2], 4
      %s21 = int_to_ptr.vmem [resolvable:$true] %s20
      %26 = dma.hbm_to_vmem [thread:$0]  %s19, 256, %s21, [#allocation3], 128, 128, 8
    $region5: #{tpu_custom_call.1} parent=1 // pred_fallthru
      _
    // Predicated region
    $region6: #{tpu_custom_call.1} parent=1 // pred_check
      _
    $region7: #{tpu_custom_call.1} parent=1 // pred_check_branch
      %28 = sbr.rel (0) target = $region9
    $region8: #{tpu_custom_call.1} parent=1 // pred_region
      %30 = vsyncadd [#allocation6], 0
      %s31 = sshll.u32 %s1, 4
      %s32 = int_to_ptr.hbm [resolvable:$true] %s31
      %s33 = sshll.u32 [#allocation5], 4
      %s34 = int_to_ptr.vmem [resolvable:$true] %s33
      %39 = dma.hbm_to_vmem [thread:$0]  %s32, 256, %s34, [#allocation6], 128, 128, 8
    $region9: #{tpu_custom_call.1} parent=1 // pred_fallthru
      _
    // Predicated region
    $region10: #{tpu_custom_call.1} parent=1 // pred_check
      _
    $region11: #{tpu_custom_call.1} parent=1 // pred_check_branch
      %41 = sbr.rel (0) target = $region13
    $region12: #{tpu_custom_call.1} parent=1 // pred_region
      %43 = vsyncadd [#allocation6], 0
      %s44 = sshll.u32 %s2, 4
      %s45 = int_to_ptr.hbm [resolvable:$true] %s44
      %s46 = sshll.u32 [#allocation7], 4
      %s47 = int_to_ptr.vmem [resolvable:$true] %s46
      %52 = dma.hbm_to_vmem [thread:$0]  %s45, 256, %s47, [#allocation6], 128, 128, 8
    $region13: #{tpu_custom_call.1} parent=1 // pred_fallthru
      _
    // Predicated region
    $region14: #{tpu_custom_call.1} parent=1 // pred_check
      _
    $region15: #{tpu_custom_call.1} parent=1 // pred_check_branch
      %54 = sbr.rel (0) target = $region17
    $region16: #{tpu_custom_call.1} parent=1 // pred_region
      %56 = vsyncadd [#allocation9], 0
      %s57 = sshll.u32 %s3, 4
      %s58 = int_to_ptr.hbm [resolvable:$true] %s57
      %s59 = sshll.u32 [#allocation8], 4
      %s60 = int_to_ptr.vmem [resolvable:$true] %s59
      %65 = dma.hbm_to_vmem [thread:$0]  %s58, 2048, %s60, [#allocation9], 128, 128, 8
    $region17: #{tpu_custom_call.1} parent=1 // pred_fallthru
      _
    // Predicated region
    $region18: #{tpu_custom_call.1} parent=1 // pred_check
      _
    $region19: #{tpu_custom_call.1} parent=1 // pred_check_branch
      %67 = sbr.rel (0) target = $region21
    $region20: #{tpu_custom_call.1} parent=1 // pred_region
      %69 = vsyncadd [#allocation9], 0
      %s70 = sshll.u32 %s4, 4
      %s71 = int_to_ptr.hbm [resolvable:$true] %s70
      %s72 = sshll.u32 [#allocation10], 4
      %s73 = int_to_ptr.vmem [resolvable:$true] %s72
      %78 = dma.hbm_to_vmem [thread:$0]  %s71, 256, %s73, [#allocation9], 128, 128, 8
    $region21: #{tpu_custom_call.1} parent=1 // pred_fallthru
      _
    // Predicated region
    $region22: #{tpu_custom_call.1} parent=1 // pred_check
      _
    $region23: #{tpu_custom_call.1} parent=1 // pred_check_branch
      %80 = sbr.rel (0) target = $region25
    $region24: #{tpu_custom_call.1} parent=1 // pred_region
      %82 = dma.done [#allocation3], 256
    $region25: #{tpu_custom_call.1} parent=1 // pred_fallthru
      _
    // Predicated region
    $region26: #{tpu_custom_call.1} parent=1 // pred_check
      _
    $region27: #{tpu_custom_call.1} parent=1 // pred_check_branch
      %84 = sbr.rel (0) target = $region29
    $region28: #{tpu_custom_call.1} parent=1 // pred_region
      %86 = dma.done [#allocation6], 256
    $region29: #{tpu_custom_call.1} parent=1 // pred_fallthru
      _
    // Predicated region
    $region30: #{tpu_custom_call.1} parent=1 // pred_check
      _
    $region31: #{tpu_custom_call.1} parent=1 // pred_check_branch
      %88 = sbr.rel (0) target = $region33
    $region32: #{tpu_custom_call.1} parent=1 // pred_region
      %90 = dma.done [#allocation6], 256
    $region33: #{tpu_custom_call.1} parent=1 // pred_fallthru
      _
    // Predicated region
    $region34: #{tpu_custom_call.1} parent=1 // pred_check
      _
    $region35: #{tpu_custom_call.1} parent=1 // pred_check_branch
      %92 = sbr.rel (0) target = $region37
    $region36: #{tpu_custom_call.1} parent=1 // pred_region
      %94 = dma.done [#allocation9], 2048
    $region37: #{tpu_custom_call.1} parent=1 // pred_fallthru
      _
    // Predicated region
    $region38: #{tpu_custom_call.1} parent=1 // pred_check
      _
    $region39: #{tpu_custom_call.1} parent=1 // pred_check_branch
      %96 = sbr.rel (0) target = $region41
    $region40: #{tpu_custom_call.1} parent=1 // pred_region
      %98 = dma.done [#allocation9], 256
    $region41: #{tpu_custom_call.1} parent=1 // pred_fallthru
      _
    %v99 = vld [vmem:[#allocation2] sm:$0xff]
    %v100 = vld [vmem:[#allocation2 + $0x8] sm:$0xff]
    %v101 = vld [vmem:[#allocation5] sm:$0xff]
    %v102 = vld [vmem:[#allocation5 + $0x8] sm:$0xff]
    %v103 = vld [vmem:[#allocation7] sm:$0xff]
    %v104 = vld [vmem:[#allocation7 + $0x8] sm:$0xff]
    %v105 = vld [vmem:[#allocation8] sm:$0xff]
    %v106 = vld [vmem:[#allocation8 + $0x8] sm:$0xff]
    %v107 = vld [vmem:[#allocation8 + $0x10] sm:$0xff]
    %v108 = vld [vmem:[#allocation8 + $0x18] sm:$0xff]
    %v109 = vld [vmem:[#allocation8 + $0x20] sm:$0xff]
    %v110 = vld [vmem:[#allocation8 + $0x28] sm:$0xff]
    %v111 = vld [vmem:[#allocation8 + $0x30] sm:$0xff]
    %v112 = vld [vmem:[#allocation8 + $0x38] sm:$0xff]
    %v113 = vld [vmem:[#allocation8 + $0x40] sm:$0xff]
    %v114 = vld [vmem:[#allocation8 + $0x48] sm:$0xff]
    %v115 = vld [vmem:[#allocation8 + $0x50] sm:$0xff]
    %v116 = vld [vmem:[#allocation8 + $0x58] sm:$0xff]
    %v117 = vld [vmem:[#allocation8 + $0x60] sm:$0xff]
    %v118 = vld [vmem:[#allocation8 + $0x68] sm:$0xff]
    %v119 = vld [vmem:[#allocation8 + $0x70] sm:$0xff]
    %v120 = vld [vmem:[#allocation8 + $0x78] sm:$0xff]
    %v121 = vld [vmem:[#allocation10] sm:$0xff]
    %v122 = vld [vmem:[#allocation10 + $0x8] sm:$0xff]
    %vm123 = vcmask 130048
    %v125 = vsel %vm123, %v103, 0
    %v128 = vsel %vm123, %v104, 0
    %130 = vmatpush.msra.mxu0 0.0
    %131 = vmatpush.msra.mxu0 0.0
    %132 = vmatpush.msra.mxu0 0.0
    %133 = vmatpush.msra.mxu0 0.0
    %134 = vmatpush.msra.mxu0 0.0
    %135 = vmatpush.msra.mxu0 0.0
    %136 = vmatpush.msra.mxu0 0.0
    %137 = vmatpush.msra.mxu0 0.0
    %138 = vmatpush.msra.mxu0 0.0
    %139 = vmatpush.msra.mxu0 0.0
    %140 = vmatpush.msra.mxu0 0.0
    %141 = vmatpush.msra.mxu0 0.0
    %142 = vmatpush.msra.mxu0 0.0
    %143 = vmatpush.msra.mxu0 0.0
    %144 = vmatpush.msra.mxu0 %v100
    %145 = vmatpush.msra.mxu0 %v99
    %146 = vmatmul.f32.gmra.mxu0 %v125
    %v147 = vpop.f32.mrf.mxu0
    %v148 = vadd.f32 0.0, %v147
    %149 = vmatmul.f32.gmra.mxu0 %v128
    %v150 = vpop.f32.mrf.mxu0
    %v151 = vadd.f32 0.0, %v150
    %152 = vdwg.mxu0
    %153 = vmatpush.msra.mxu0 %v120
    %154 = vmatpush.msra.mxu0 %v119
    %155 = vmatpush.msra.mxu0 %v118
    %156 = vmatpush.msra.mxu0 %v117
    %157 = vmatpush.msra.mxu0 %v116
    %158 = vmatpush.msra.mxu0 %v115
    %159 = vmatpush.msra.mxu0 %v114
    %160 = vmatpush.msra.mxu0 %v113
    %161 = vmatpush.msra.mxu0 %v112
    %162 = vmatpush.msra.mxu0 %v111
    %163 = vmatpush.msra.mxu0 %v110
    %164 = vmatpush.msra.mxu0 %v109
    %165 = vmatpush.msra.mxu0 %v108
    %166 = vmatpush.msra.mxu0 %v107
    %167 = vmatpush.msra.mxu0 %v106
    %168 = vmatpush.msra.mxu0 %v105
    %169 = vmatmul.f32.gmra.mxu0 %v148
    %v170 = vpop.f32.mrf.mxu0
    %v171 = vadd.f32 0.0, %v170
    %172 = vmatmul.f32.gmra.mxu0 %v151
    %v173 = vpop.f32.mrf.mxu0
    %v174 = vadd.f32 0.0, %v173
    %175 = vdwg.mxu0
    %v176 = vmul.f32 %v171, %v121
    %v177 = vmul.f32 %v174, %v122
    %178 = vmatpush.msra.mxu0 0.0
    %179 = vmatpush.msra.mxu0 0.0
    %180 = vmatpush.msra.mxu0 0.0
    %181 = vmatpush.msra.mxu0 0.0
    %182 = vmatpush.msra.mxu0 0.0
    %183 = vmatpush.msra.mxu0 0.0
    %184 = vmatpush.msra.mxu0 0.0
    %185 = vmatpush.msra.mxu0 0.0
    %186 = vmatpush.msra.mxu0 0.0
    %187 = vmatpush.msra.mxu0 0.0
    %188 = vmatpush.msra.mxu0 0.0
    %189 = vmatpush.msra.mxu0 0.0
    %190 = vmatpush.msra.mxu0 0.0
    %191 = vmatpush.msra.mxu0 0.0
    %192 = vmatpush.msra.mxu0 %v102
    %193 = vmatpush.msra.mxu0 %v101
    %194 = vmatmul.f32.gmra.mxu0 %v125
    %v195 = vpop.f32.mrf.mxu0
    %v196 = vadd.f32 0.0, %v195
    %197 = vmatmul.f32.gmra.mxu0 %v128
    %v198 = vpop.f32.mrf.mxu0
    %v199 = vadd.f32 0.0, %v198
    %200 = vdwg.mxu0
    %201 = vmatpush.msra.mxu0 %v120
    %202 = vmatpush.msra.mxu0 %v119
    %203 = vmatpush.msra.mxu0 %v118
    %204 = vmatpush.msra.mxu0 %v117
    %205 = vmatpush.msra.mxu0 %v116
    %206 = vmatpush.msra.mxu0 %v115
    %207 = vmatpush.msra.mxu0 %v114
    %208 = vmatpush.msra.mxu0 %v113
    %209 = vmatpush.msra.mxu0 %v112
    %210 = vmatpush.msra.mxu0 %v111
    %211 = vmatpush.msra.mxu0 %v110
    %212 = vmatpush.msra.mxu0 %v109
    %213 = vmatpush.msra.mxu0 %v108
    %214 = vmatpush.msra.mxu0 %v107
    %215 = vmatpush.msra.mxu0 %v106
    %216 = vmatpush.msra.mxu0 %v105
    %217 = vmatmul.f32.gmra.mxu0 %v196
    %v218 = vpop.f32.mrf.mxu0
    %v219 = vadd.f32 0.0, %v218
    %220 = vmatmul.f32.gmra.mxu0 %v199
    %v221 = vpop.f32.mrf.mxu0
    %v222 = vadd.f32 0.0, %v221
    %223 = vdwg.mxu0
    %v224 = vmul.f32 %v219, %v121
    %v225 = vmul.f32 %v222, %v122
    %v226 = vmul.f32 %v99, %v101
    %v227 = vmul.f32 %v100, %v102
    %228 = vmatpush.msra.mxu0 0.0
    %229 = vmatpush.msra.mxu0 0.0
    %230 = vmatpush.msra.mxu0 0.0
    %231 = vmatpush.msra.mxu0 0.0
    %232 = vmatpush.msra.mxu0 0.0
    %233 = vmatpush.msra.mxu0 0.0
    %234 = vmatpush.msra.mxu0 0.0
    %235 = vmatpush.msra.mxu0 0.0
    %236 = vmatpush.msra.mxu0 0.0
    %237 = vmatpush.msra.mxu0 0.0
    %238 = vmatpush.msra.mxu0 0.0
    %239 = vmatpush.msra.mxu0 0.0
    %240 = vmatpush.msra.mxu0 0.0
    %241 = vmatpush.msra.mxu0 0.0
    %242 = vmatpush.msra.mxu0 %v227
    %243 = vmatpush.msra.mxu0 %v226
    %244 = vmatmul.f32.gmra.mxu0 %v125
    %v245 = vpop.f32.mrf.mxu0
    %v246 = vadd.f32 0.0, %v245
    %247 = vmatmul.f32.gmra.mxu0 %v128
    %v248 = vpop.f32.mrf.mxu0
    %v249 = vadd.f32 0.0, %v248
    %250 = vdwg.mxu0
    %251 = vmatpush.msra.mxu0 %v120
    %252 = vmatpush.msra.mxu0 %v119
    %253 = vmatpush.msra.mxu0 %v118
    %254 = vmatpush.msra.mxu0 %v117
    %255 = vmatpush.msra.mxu0 %v116
    %256 = vmatpush.msra.mxu0 %v115
    %257 = vmatpush.msra.mxu0 %v114
    %258 = vmatpush.msra.mxu0 %v113
    %259 = vmatpush.msra.mxu0 %v112
    %260 = vmatpush.msra.mxu0 %v111
    %261 = vmatpush.msra.mxu0 %v110
    %262 = vmatpush.msra.mxu0 %v109
    %263 = vmatpush.msra.mxu0 %v108
    %264 = vmatpush.msra.mxu0 %v107
    %265 = vmatpush.msra.mxu0 %v106
    %266 = vmatpush.msra.mxu0 %v105
    %267 = vmatmul.f32.gmra.mxu0 %v246
    %v268 = vpop.f32.mrf.mxu0
    %v269 = vadd.f32 0.0, %v268
    %270 = vmatmul.f32.gmra.mxu0 %v249
    %v271 = vpop.f32.mrf.mxu0
    %v272 = vadd.f32 0.0, %v271
    %273 = vdwg.mxu0
    %v274 = vmul.f32 %v269, %v121
    %v275 = vmul.f32 %v272, %v122
    %v276 = vmul.f32 %v176, %v224
    %v277 = vmul.f32 %v177, %v225
    %v278 = vsub.f32 %v274, %v276
    %v279 = vsub.f32 %v275, %v277
    %v280 = vmul.f32 %v99, %v99
    %v281 = vmul.f32 %v100, %v100
    %282 = vmatpush.msra.mxu0 0.0
    %283 = vmatpush.msra.mxu0 0.0
    %284 = vmatpush.msra.mxu0 0.0
    %285 = vmatpush.msra.mxu0 0.0
    %286 = vmatpush.msra.mxu0 0.0
    %287 = vmatpush.msra.mxu0 0.0
    %288 = vmatpush.msra.mxu0 0.0
    %289 = vmatpush.msra.mxu0 0.0
    %290 = vmatpush.msra.mxu0 0.0
    %291 = vmatpush.msra.mxu0 0.0
    %292 = vmatpush.msra.mxu0 0.0
    %293 = vmatpush.msra.mxu0 0.0
    %294 = vmatpush.msra.mxu0 0.0
    %295 = vmatpush.msra.mxu0 0.0
    %296 = vmatpush.msra.mxu0 %v281
    %297 = vmatpush.msra.mxu0 %v280
    %298 = vmatmul.f32.gmra.mxu0 %v125
    %v299 = vpop.f32.mrf.mxu0
    %v300 = vadd.f32 0.0, %v299
    %301 = vmatmul.f32.gmra.mxu0 %v128
    %v302 = vpop.f32.mrf.mxu0
    %v303 = vadd.f32 0.0, %v302
    %304 = vdwg.mxu0
    %305 = vmatpush.msra.mxu0 %v120
    %306 = vmatpush.msra.mxu0 %v119
    %307 = vmatpush.msra.mxu0 %v118
    %308 = vmatpush.msra.mxu0 %v117
    %309 = vmatpush.msra.mxu0 %v116
    %310 = vmatpush.msra.mxu0 %v115
    %311 = vmatpush.msra.mxu0 %v114
    %312 = vmatpush.msra.mxu0 %v113
    %313 = vmatpush.msra.mxu0 %v112
    %314 = vmatpush.msra.mxu0 %v111
    %315 = vmatpush.msra.mxu0 %v110
    %316 = vmatpush.msra.mxu0 %v109
    %317 = vmatpush.msra.mxu0 %v108
    %318 = vmatpush.msra.mxu0 %v107
    %319 = vmatpush.msra.mxu0 %v106
    %320 = vmatpush.msra.mxu0 %v105
    %321 = vmatmul.f32.gmra.mxu0 %v300
    %v322 = vpop.f32.mrf.mxu0
    %v323 = vadd.f32 0.0, %v322
    %324 = vmatmul.f32.gmra.mxu0 %v303
    %v325 = vpop.f32.mrf.mxu0
    %v326 = vadd.f32 0.0, %v325
    %327 = vdwg.mxu0
    %v328 = vmul.f32 %v323, %v121
    %v329 = vmul.f32 %v326, %v122
    %v330 = vmul.f32 %v176, %v176
    %v331 = vmul.f32 %v177, %v177
    %v332 = vsub.f32 %v328, %v330
    %v333 = vsub.f32 %v329, %v331
    %v334 = vadd.f32 %v332, 1e-08
    %v335 = vadd.f32 %v333, 1e-08
    %v336 = vrcp.pop %v334
    %v337 = vmul.f32 %v334, %v336
    %v338 = vsub.f32 1.0, %v337
    %v339 = vmul.f32 %v336, %v338
    %v340 = vadd.f32 %v336, %v339
    %vm341 = vweird.f32 %v334
    %vm342 = vweird.f32 %v336
    %vm343 = vmor %vm341, %vm342
    %v344 = vsel %vm343, %v336, %v340
    %v345 = vand.u32 2147483647, %v334
    %vm346 = vcmp.eq.f32.partialorder %v345, 8.507059e+37
    %v347 = vand.u32 %v334, 2147483648
    %v348 = vor.u32 1.1754944e-38, %v347
    %v349 = vsel %vm346, %v348, %v344
    %v350 = vmul.f32 %v278, %v349
    %v351 = vrcp.pop %v335
    %v352 = vmul.f32 %v335, %v351
    %v353 = vsub.f32 1.0, %v352
    %v354 = vmul.f32 %v351, %v353
    %v355 = vadd.f32 %v351, %v354
    %vm356 = vweird.f32 %v335
    %vm357 = vweird.f32 %v351
    %vm358 = vmor %vm356, %vm357
    %v359 = vsel %vm358, %v351, %v355
    %v360 = vand.u32 2147483647, %v335
    %vm361 = vcmp.eq.f32.partialorder %v360, 8.507059e+37
    %v362 = vand.u32 %v335, 2147483648
    %v363 = vor.u32 1.1754944e-38, %v362
    %v364 = vsel %vm361, %v363, %v359
    %v365 = vmul.f32 %v279, %v364
    %v366 = vmul.f32 %v350, %v176
    %v367 = vmul.f32 %v365, %v177
    %v368 = vsub.f32 %v224, %v366
    %v369 = vsub.f32 %v225, %v367
    %370 = vmatpush.msra.mxu0 0.0
    %371 = vmatpush.msra.mxu0 0.0
    %372 = vmatpush.msra.mxu0 0.0
    %373 = vmatpush.msra.mxu0 0.0
    %374 = vmatpush.msra.mxu0 0.0
    %375 = vmatpush.msra.mxu0 0.0
    %376 = vmatpush.msra.mxu0 0.0
    %377 = vmatpush.msra.mxu0 0.0
    %378 = vmatpush.msra.mxu0 0.0
    %379 = vmatpush.msra.mxu0 0.0
    %380 = vmatpush.msra.mxu0 0.0
    %381 = vmatpush.msra.mxu0 0.0
    %382 = vmatpush.msra.mxu0 0.0
    %383 = vmatpush.msra.mxu0 0.0
    %384 = vmatpush.msra.mxu0 %v365
    %385 = vmatpush.msra.mxu0 %v350
    %386 = vmatmul.f32.gmra.mxu0 %v125
    %v387 = vpop.f32.mrf.mxu0
    %v388 = vadd.f32 0.0, %v387
    %389 = vmatmul.f32.gmra.mxu0 %v128
    %v390 = vpop.f32.mrf.mxu0
    %v391 = vadd.f32 0.0, %v390
    %392 = vdwg.mxu0
    %393 = vmatpush.msra.mxu0 %v120
    %394 = vmatpush.msra.mxu0 %v119
    %395 = vmatpush.msra.mxu0 %v118
    %396 = vmatpush.msra.mxu0 %v117
    %397 = vmatpush.msra.mxu0 %v116
    %398 = vmatpush.msra.mxu0 %v115
    %399 = vmatpush.msra.mxu0 %v114
    %400 = vmatpush.msra.mxu0 %v113
    %401 = vmatpush.msra.mxu0 %v112
    %402 = vmatpush.msra.mxu0 %v111
    %403 = vmatpush.msra.mxu0 %v110
    %404 = vmatpush.msra.mxu0 %v109
    %405 = vmatpush.msra.mxu0 %v108
    %406 = vmatpush.msra.mxu0 %v107
    %407 = vmatpush.msra.mxu0 %v106
    %408 = vmatpush.msra.mxu0 %v105
    %409 = vmatmul.f32.gmra.mxu0 %v388
    %v410 = vpop.f32.mrf.mxu0
    %v411 = vadd.f32 0.0, %v410
    %412 = vmatmul.f32.gmra.mxu0 %v391
    %v413 = vpop.f32.mrf.mxu0
    %v414 = vadd.f32 0.0, %v413
    %415 = vdwg.mxu0
    %v416 = vmul.f32 %v411, %v121
    %v417 = vmul.f32 %v414, %v122
    %418 = vmatpush.msra.mxu0 0.0
    %419 = vmatpush.msra.mxu0 0.0
    %420 = vmatpush.msra.mxu0 0.0
    %421 = vmatpush.msra.mxu0 0.0
    %422 = vmatpush.msra.mxu0 0.0
    %423 = vmatpush.msra.mxu0 0.0
    %424 = vmatpush.msra.mxu0 0.0
    %425 = vmatpush.msra.mxu0 0.0
    %426 = vmatpush.msra.mxu0 0.0
    %427 = vmatpush.msra.mxu0 0.0
    %428 = vmatpush.msra.mxu0 0.0
    %429 = vmatpush.msra.mxu0 0.0
    %430 = vmatpush.msra.mxu0 0.0
    %431 = vmatpush.msra.mxu0 0.0
    %432 = vmatpush.msra.mxu0 %v369
    %433 = vmatpush.msra.mxu0 %v368
    %434 = vmatmul.f32.gmra.mxu0 %v125
    %v435 = vpop.f32.mrf.mxu0
    %v436 = vadd.f32 0.0, %v435
    %437 = vmatmul.f32.gmra.mxu0 %v128
    %v438 = vpop.f32.mrf.mxu0
    %v439 = vadd.f32 0.0, %v438
    %440 = vdwg.mxu0
    %441 = vmatpush.msra.mxu0 %v120
    %442 = vmatpush.msra.mxu0 %v119
    %443 = vmatpush.msra.mxu0 %v118
    %444 = vmatpush.msra.mxu0 %v117
    %445 = vmatpush.msra.mxu0 %v116
    %446 = vmatpush.msra.mxu0 %v115
    %447 = vmatpush.msra.mxu0 %v114
    %448 = vmatpush.msra.mxu0 %v113
    %449 = vmatpush.msra.mxu0 %v112
    %450 = vmatpush.msra.mxu0 %v111
    %451 = vmatpush.msra.mxu0 %v110
    %452 = vmatpush.msra.mxu0 %v109
    %453 = vmatpush.msra.mxu0 %v108
    %454 = vmatpush.msra.mxu0 %v107
    %455 = vmatpush.msra.mxu0 %v106
    %456 = vmatpush.msra.mxu0 %v105
    %457 = vmatmul.f32.gmra.mxu0 %v436
    %v458 = vpop.f32.mrf.mxu0
    %v459 = vadd.f32 0.0, %v458
    %460 = vmatmul.f32.gmra.mxu0 %v439
    %v461 = vpop.f32.mrf.mxu0
    %v462 = vadd.f32 0.0, %v461
    %463 = vdwg.mxu0
    %v464 = vmul.f32 %v459, %v121
    %v465 = vmul.f32 %v462, %v122
    %v466 = vmul.f32 %v416, %v99
    %v467 = vmul.f32 %v417, %v100
    %v468 = vadd.f32 %v466, %v464
    %v469 = vadd.f32 %v467, %v465
    %470 = vst [vmem:[#allocation11] sm:$0xff] %v468
    %471 = vst [vmem:[#allocation11 + $0x8] sm:$0xff] %v469
    // Predicated region
    $region42: #{tpu_custom_call.1} parent=1 // pred_check
      _
    $region43: #{tpu_custom_call.1} parent=1 // pred_check_branch
      %473 = sbr.rel (0) target = $region45
    $region44: #{tpu_custom_call.1} parent=1 // pred_region
      %475 = vsyncadd [#allocation4], 0
      %s476 = sshll.u32 [#allocation11], 4
      %s477 = int_to_ptr.vmem [resolvable:$true] %s476
      %s478 = sshll.u32 %s5, 4
      %s479 = int_to_ptr.hbm [resolvable:$true] %s478
      %484 = dma.vmem_to_hbm [thread:$0]  %s477, 256, %s479, [#allocation4], 128, 128, 8
    $region45: #{tpu_custom_call.1} parent=1 // pred_fallthru
      _
    // Predicated region
    $region46: #{tpu_custom_call.1} parent=1 // pred_check
      _
    $region47: #{tpu_custom_call.1} parent=1 // pred_check_branch
      %486 = sbr.rel (0) target = $region49
    $region48: #{tpu_custom_call.1} parent=1 // pred_region
      %488 = dma.done [#allocation4], 256
    $region49: #{tpu_custom_call.1} parent=1 // pred_fallthru
      _
    %489 = vsyncpa [#allocation3], 1
    %490 = vsyncpa [#allocation6], 1
    %491 = vsyncpa [#allocation9], 1
    %492 = vsyncpa [#allocation4], 1

</llo_original>
